<compile_context>
chip_gen: v7x
topology: tpu7x:2x2x1
jax: 0.10.0
libtpu: 0.0.40
codegen_flags: <defaults>
</compile_context>

<pallas_src>
import functools

import jax
import jax.numpy as jnp
from jax import lax
from jax.experimental import pallas as pl
from jax.experimental.pallas import tpu as pltpu

ALPHA = 0.7
BETA = 0.3
SMOOTH = 1e-06

_LANES = 128
_ACC_ROWS = 512                 # fixed accumulator rows (multiple of 32)
_TARGET_STEP_BYTES = 4 << 20    # ~4 MiB of input (both operands) per grid step
_MAX_BLOCK_ROWS = 8192


def _ceil_div(a, b):
    return -(-a // b)


def _tversky_kernel(p_ref, t_ref, out_pt_ref, out_w_ref, acc_pt_ref, acc_w_ref,
                    *, rows, block_rows, acc_rows, subblocks, tiles_per_split,
                    needs_mask, alpha, beta):
    s = pl.program_id(0)        # core-split axis (parallel / core_parallel)
    i = pl.program_id(1)        # tile-within-split axis (reduction)

    @pl.when(i == 0)
    def _init():
        acc_pt_ref[...] = jnp.zeros_like(acc_pt_ref)
        acc_w_ref[...] = jnp.zeros_like(acc_w_ref)

    def sub(ref, j):
        # Per-sub-slice load + upcast keeps f32 temporaries at (acc_rows, 128).
        return ref[j * acc_rows:(j + 1) * acc_rows, :].astype(jnp.float32)

    def accumulate(load):
        # Fuse all sub-slices of this block into ONE read-modify-write of each
        # accumulator (amortizes accumulator vld/vst over `subblocks` slices).
        prod = psum = tsum = None
        for j in range(subblocks):
            pj, tj = load(j)
            if j == 0:
                prod, psum, tsum = pj * tj, pj, tj
            else:
                prod = prod + pj * tj
                psum = psum + pj
                tsum = tsum + tj
        acc_pt_ref[...] += prod
        acc_w_ref[...] += beta * psum + alpha * tsum

    def load_plain(j):
        return sub(p_ref, j), sub(t_ref, j)

    if needs_mask:
        tile = s * tiles_per_split + i            # logical (unclamped) tile
        row0 = tile * block_rows
        is_interior = row0 + block_rows <= rows

        def load_masked(j):
            # NOTE: mask BOTH operands BEFORE any arithmetic.  Out-of-bounds
            # rows of the block contain garbage (possibly NaN); select-with-0
            # kills it, whereas NaN * 0 would not.
            r0 = row0 + j * acc_rows
            row_ids = r0 + lax.broadcasted_iota(jnp.int32, (acc_rows, _LANES), 0)
            valid = row_ids < rows
            pj = jnp.where(valid, sub(p_ref, j), 0.0)
            tj = jnp.where(valid, sub(t_ref, j), 0.0)
            return pj, tj

        @pl.when(is_interior)
        def _interior():                          # no mask cost on inner tiles
            accumulate(load_plain)

        @pl.when(jnp.logical_not(is_interior))
        def _tail():                              # ragged or phantom tile
            accumulate(load_masked)
    else:
        accumulate(load_plain)

    @pl.when(i == pl.num_programs(1) - 1)
    def _finalize():
        # The only cross-lane/sublane reduction, done once per core split.
        out_pt_ref[...] = jnp.broadcast_to(jnp.sum(acc_pt_ref[...]),
                                           out_pt_ref.shape)
        out_w_ref[...] = jnp.broadcast_to(jnp.sum(acc_w_ref[...]),
                                          out_w_ref.shape)


def _streamable(x):
    # Floats stream in their native dtype (bf16 stays 2 B/elem in HBM);
    # bool / integer 0-1 masks stream as int8 (1 B/elem) and upcast in-kernel.
    if jnp.issubdtype(x.dtype, jnp.floating):
        if x.dtype == jnp.float64:
            x = x.astype(jnp.float32)
    else:
        x = x.astype(jnp.int8)
    return jnp.ravel(x)


def tversky_loss(y_pred, y_true, alpha=ALPHA, beta=BETA, smooth=SMOOTH,
                 block_rows=None):
    assert y_pred.shape == y_true.shape, "y_pred / y_true must match shapes"

    p = _streamable(y_pred)
    t = _streamable(y_true)

    total = p.shape[0]
    padded_len = _ceil_div(total, _LANES) * _LANES
    if padded_len != total:
        # TODO(synk): lane-tail pad is an extra HBM copy of both inputs; a 1-D
        # manual-DMA kernel with a flat-index mask would avoid it, but typical
        # NCHW segmentation sizes are lane-aligned so this path is rarely hit.
        p = jnp.pad(p, (0, padded_len - total))
        t = jnp.pad(t, (0, padded_len - total))

    rows = padded_len // _LANES
    p2d = p.reshape(rows, _LANES)
    t2d = t.reshape(rows, _LANES)

    if block_rows is None:
        # ~4 MiB of input per grid step (both operands combined), rounded to a
        # multiple of _ACC_ROWS so blocks tile the fixed-size accumulators.
        bytes_per_row = _LANES * (p2d.dtype.itemsize + t2d.dtype.itemsize)
        block_rows = (_TARGET_STEP_BYTES // bytes_per_row) // _ACC_ROWS * _ACC_ROWS
        block_rows = max(_ACC_ROWS, min(_MAX_BLOCK_ROWS, block_rows))
    else:
        assert block_rows % _ACC_ROWS == 0 or block_rows >= rows

    if rows <= block_rows:
        # Single full-extent block: always a legal tiling, exact, no mask.
        block_rows = rows
        acc_rows = rows
        subblocks = 1
        total_tiles = 1
    else:
        acc_rows = _ACC_ROWS
        subblocks = block_rows // _ACC_ROWS
        total_tiles = _ceil_div(rows, block_rows)

    num_splits = 2 if total_tiles >= 2 else 1     # both TensorCores on v7x
    tiles_per_split = _ceil_div(total_tiles, num_splits)
    needs_mask = (num_splits * tiles_per_split * block_rows) != rows
    # Phantom tiles (odd total_tiles under a 2-way split) re-read the last real
    # tile and rely on the in-kernel row mask to zero their contribution.
    assert (num_splits * tiles_per_split == total_tiles) or needs_mask

    def in_index_map(s, i):
        tile = s * tiles_per_split + i
        # Clamp phantom tiles; their contribution is fully masked in-kernel.
        return (jnp.minimum(tile, total_tiles - 1), 0)

    def out_index_map(s, i):
        return (s, 0, 0)

    kernel = functools.partial(
        _tversky_kernel, rows=rows, block_rows=block_rows, acc_rows=acc_rows,
        subblocks=subblocks, tiles_per_split=tiles_per_split,
        needs_mask=needs_mask, alpha=float(alpha), beta=float(beta))

    partial_shape = jax.ShapeDtypeStruct((num_splits, 8, _LANES), jnp.float32)
    out_spec = pl.BlockSpec((1, 8, _LANES), out_index_map)

    bytes_accessed = (p2d.size * p2d.dtype.itemsize
                      + t2d.size * t2d.dtype.itemsize
                      + 2 * num_splits * 8 * _LANES * 4)
    cost = pl.CostEstimate(flops=6 * padded_len, transcendentals=0,
                           bytes_accessed=bytes_accessed)

    # Only v7x has 2 TensorCores; CORE_PARALLEL there guarantees the split
    # axis is actually core-sharded.  Elsewhere keep PARALLEL for portability.
    try:
        kind = jax.devices()[0].device_kind.lower()
    except Exception:
        kind = ""
    split_sem = (pltpu.CORE_PARALLEL
                 if ("v7" in kind and num_splits > 1) else pltpu.PARALLEL)

    out_pt, out_w = pl.pallas_call(
        kernel,
        out_shape=(partial_shape, partial_shape),
        grid_spec=pltpu.PrefetchScalarGridSpec(
            num_scalar_prefetch=0,
            grid=(num_splits, tiles_per_split),
            in_specs=[pl.BlockSpec((block_rows, _LANES), in_index_map),
                      pl.BlockSpec((block_rows, _LANES), in_index_map)],
            out_specs=[out_spec, out_spec],
            scratch_shapes=[pltpu.VMEM((acc_rows, _LANES), jnp.float32)] * 2,
        ),
        compiler_params=pltpu.CompilerParams(
            dimension_semantics=(split_sem, pltpu.ARBITRARY),
            vmem_limit_bytes=32 * 1024 * 1024,
        ),
        cost_estimate=cost,
    )(p2d, t2d)

    # Tiny cross-core combine + final Tversky formula in plain JAX.
    inter = jnp.sum(out_pt[:, 0, 0])          # sum(p * t)
    sum_w = jnp.sum(out_w[:, 0, 0])           # beta*sum(p) + alpha*sum(t)
    # denom = inter + alpha*fn + beta*fp  with fn = sum_t - inter, fp = sum_p - inter
    denom = inter * (1.0 - alpha - beta) + sum_w + smooth
    tversky_index = (inter + smooth) / denom
    return 1.0 - tversky_index


def _reference(y_pred, y_true, alpha=ALPHA, beta=BETA, smooth=SMOOTH):
    inter = jnp.sum(y_pred * y_true)
    fp = jnp.sum(y_pred * (1 - y_true))
    fn = jnp.sum((1 - y_pred) * y_true)
    tv = (inter + smooth) / (inter + alpha * fn + beta * fp + smooth)
    return 1.0 - tv


if __name__ == "__main__":
    key = jax.random.PRNGKey(0)
    k1, k2, k3, k4, k5, k6, k7, k8 = jax.random.split(key, 8)

    # 1) Small NCHW inputs (the module's typical segmentation use case):
    #    single full-extent block path.
    shape = (2, 4, 16, 16)
    y_pred = jax.nn.sigmoid(jax.random.normal(k1, shape, dtype=jnp.float32))
    y_true = (jax.random.uniform(k2, shape) > 0.5).astype(jnp.float32)
    loss = tversky_loss(y_pred, y_true)
    jax.block_until_ready(loss)
    ref = _reference(y_pred, y_true)
    assert jnp.allclose(loss, ref, rtol=1e-5, atol=1e-6), (loss, ref)

    # 2) f32, multi-tile big path: 2-way split, sub-slice fused accumulators,
    #    gated ragged-tail mask (4*4*200*200 = 640000 elems -> 5000 rows).
    shape2 = (4, 4, 200, 200)
    y_pred2 = jax.nn.sigmoid(jax.random.normal(k3, shape2, dtype=jnp.float32))
    y_true2 = (jax.random.uniform(k4, shape2) > 0.5).astype(jnp.float32)
    loss2 = tversky_loss(y_pred2, y_true2)
    jax.block_until_ready(loss2)
    ref2 = _reference(y_pred2, y_true2)
    assert jnp.allclose(loss2, ref2, rtol=1e-5, atol=1e-6), (loss2, ref2)

    # 3) bf16 streamed natively, forced small block to exercise multiple tiles
    #    per split + a fully-masked phantom tile (2500 rows, block 1024).
    shape3 = (2, 4, 200, 200)
    y_pred3 = jax.nn.sigmoid(jax.random.normal(k5, shape3)).astype(jnp.bfloat16)
    y_true3 = (jax.random.uniform(k6, shape3) > 0.5).astype(jnp.bfloat16)
    loss3 = tversky_loss(y_pred3, y_true3, block_rows=1024)
    jax.block_until_ready(loss3)
    ref3 = _reference(y_pred3.astype(jnp.float32), y_true3.astype(jnp.float32))
    assert jnp.allclose(loss3, ref3, rtol=5e-4, atol=1e-5), (loss3, ref3)

    # 4) bool target streamed as int8 + non-lane-aligned total (pad fallback).
    shape4 = (2, 3, 32, 33)
    y_pred4 = jax.nn.sigmoid(jax.random.normal(k7, shape4, dtype=jnp.float32))
    y_true4 = jax.random.uniform(k8, shape4) > 0.5
    loss4 = tversky_loss(y_pred4, y_true4)
    jax.block_until_ready(loss4)
    ref4 = _reference(y_pred4, y_true4.astype(jnp.float32))
    assert jnp.allclose(loss4, ref4, rtol=1e-5, atol=1e-6), (loss4, ref4)

    print("KERNEL_OK")
</pallas_src>

<mosaic_0001>
module attributes {stable_mosaic.version = 11 : i64} {
  func.func @_tversky_kernel(%arg0: i32, %arg1: i32, %arg2: memref<16x128xf32, #tpu.memory_space<vmem>>, %arg3: memref<16x128xf32, #tpu.memory_space<vmem>>, %arg4: memref<1x8x128xf32, #tpu.memory_space<vmem>>, %arg5: memref<1x8x128xf32, #tpu.memory_space<vmem>>, %arg6: memref<16x128xf32, #tpu.memory_space<vmem>>, %arg7: memref<16x128xf32, #tpu.memory_space<vmem>>) attributes {dimension_semantics = [#tpu.dimension_semantics<parallel>, #tpu.dimension_semantics<arbitrary>], iteration_bounds = array<i64: 1, 1>, scalar_prefetch = 0 : i64, scratch_operands = 2 : i64, tpu.core_type = #tpu.core_type<tc>, window_params = [{transform_indices = @transform_0, window_bounds = array<i64: 16, 128>}, {transform_indices = @transform_1, window_bounds = array<i64: 16, 128>}, {transform_indices = @transform_2, window_bounds = array<i64: 1, 8, 128>}, {transform_indices = @transform_3, window_bounds = array<i64: 1, 8, 128>}]} {
    %c0_i32 = arith.constant 0 : i32
    %0 = arith.cmpi eq, %arg1, %c0_i32 : i32
    %1 = arith.extui %0 : i1 to i32
    %c0_i32_0 = arith.constant 0 : i32
    %2 = arith.cmpi ne, %1, %c0_i32_0 : i32
    scf.if %2 {
      %cst_15 = arith.constant 0.000000e+00 : f32
      %20 = vector.broadcast %cst_15 : f32 to vector<16x128xf32>
      %c0_16 = arith.constant 0 : index
      %c0_17 = arith.constant 0 : index
      %21 = vector.load %arg6[%c0_16, %c0_17] : memref<16x128xf32, #tpu.memory_space<vmem>>, vector<16x128xf32>
      tpu.vector_store %arg6[%c0_16, %c0_17], %20 {strides = array<i32>} : memref<16x128xf32, #tpu.memory_space<vmem>>, vector<16x128xf32>,
      %cst_18 = arith.constant 0.000000e+00 : f32
      %22 = vector.broadcast %cst_18 : f32 to vector<16x128xf32>
      %c0_19 = arith.constant 0 : index
      %c0_20 = arith.constant 0 : index
      %23 = vector.load %arg7[%c0_19, %c0_20] : memref<16x128xf32, #tpu.memory_space<vmem>>, vector<16x128xf32>
      tpu.vector_store %arg7[%c0_19, %c0_20], %22 {strides = array<i32>} : memref<16x128xf32, #tpu.memory_space<vmem>>, vector<16x128xf32>,
    } else {
    }
    %c0 = arith.constant 0 : index
    %c0_1 = arith.constant 0 : index
    %3 = vector.load %arg2[%c0, %c0_1] : memref<16x128xf32, #tpu.memory_space<vmem>>, vector<16x128xf32>
    %c0_2 = arith.constant 0 : index
    %c0_3 = arith.constant 0 : index
    %4 = vector.load %arg3[%c0_2, %c0_3] : memref<16x128xf32, #tpu.memory_space<vmem>>, vector<16x128xf32>
    %5 = arith.mulf %3, %4 : vector<16x128xf32>
    %c0_4 = arith.constant 0 : index
    %c0_5 = arith.constant 0 : index
    %6 = vector.load %arg6[%c0_4, %c0_5] : memref<16x128xf32, #tpu.memory_space<vmem>>, vector<16x128xf32>
    %7 = arith.addf %6, %5 : vector<16x128xf32>
    %c0_6 = arith.constant 0 : index
    %c0_7 = arith.constant 0 : index
    %8 = vector.load %arg6[%c0_6, %c0_7] : memref<16x128xf32, #tpu.memory_space<vmem>>, vector<16x128xf32>
    tpu.vector_store %arg6[%c0_6, %c0_7], %7 {strides = array<i32>} : memref<16x128xf32, #tpu.memory_space<vmem>>, vector<16x128xf32>,
    %c0_8 = arith.constant 0 : index
    %c0_9 = arith.constant 0 : index
    %9 = vector.load %arg7[%c0_8, %c0_9] : memref<16x128xf32, #tpu.memory_space<vmem>>, vector<16x128xf32>
    %cst = arith.constant 3.000000e-01 : f32
    %10 = vector.broadcast %cst : f32 to vector<16x128xf32>
    %11 = arith.mulf %10, %3 : vector<16x128xf32>
    %cst_10 = arith.constant 0.699999988 : f32
    %12 = vector.broadcast %cst_10 : f32 to vector<16x128xf32>
    %13 = arith.mulf %12, %4 : vector<16x128xf32>
    %14 = arith.addf %11, %13 : vector<16x128xf32>
    %15 = arith.addf %9, %14 : vector<16x128xf32>
    %c0_11 = arith.constant 0 : index
    %c0_12 = arith.constant 0 : index
    %16 = vector.load %arg7[%c0_11, %c0_12] : memref<16x128xf32, #tpu.memory_space<vmem>>, vector<16x128xf32>
    tpu.vector_store %arg7[%c0_11, %c0_12], %15 {strides = array<i32>} : memref<16x128xf32, #tpu.memory_space<vmem>>, vector<16x128xf32>,
    %c0_i32_13 = arith.constant 0 : i32
    %17 = arith.cmpi eq, %arg1, %c0_i32_13 : i32
    %18 = arith.extui %17 : i1 to i32
    %c0_i32_14 = arith.constant 0 : i32
    %19 = arith.cmpi ne, %18, %c0_i32_14 : i32
    scf.if %19 {
      %c0_15 = arith.constant 0 : index
      %c0_16 = arith.constant 0 : index
      %20 = vector.load %arg6[%c0_15, %c0_16] : memref<16x128xf32, #tpu.memory_space<vmem>>, vector<16x128xf32>
      %21 = vector.shape_cast %20 : vector<16x128xf32> to vector<1x16x128xf32>
      %cst_17 = arith.constant dense<0.000000e+00> : vector<1xf32>
      %22 = vector.multi_reduction <add>, %21, %cst_17 [1, 2] : vector<1x16x128xf32> to vector<1xf32>
      %23 = vector.shape_cast %22 : vector<1xf32> to vector<1x1x1xf32>
      %24 = vector.extract %23[0, 0, 0] : f32 from vector<1x1x1xf32>
      %25 = vector.broadcast %24 : f32 to vector<1x8x128xf32>
      %c0_18 = arith.constant 0 : index
      %c0_19 = arith.constant 0 : index
      %c0_20 = arith.constant 0 : index
      %26 = vector.load %arg4[%c0_18, %c0_19, %c0_20] : memref<1x8x128xf32, #tpu.memory_space<vmem>>, vector<1x8x128xf32>
      tpu.vector_store %arg4[%c0_18, %c0_19, %c0_20], %25 {strides = array<i32>} : memref<1x8x128xf32, #tpu.memory_space<vmem>>, vector<1x8x128xf32>,
      %c0_21 = arith.constant 0 : index
      %c0_22 = arith.constant 0 : index
      %27 = vector.load %arg7[%c0_21, %c0_22] : memref<16x128xf32, #tpu.memory_space<vmem>>, vector<16x128xf32>
      %28 = vector.shape_cast %27 : vector<16x128xf32> to vector<1x16x128xf32>
      %cst_23 = arith.constant dense<0.000000e+00> : vector<1xf32>
      %29 = vector.multi_reduction <add>, %28, %cst_23 [1, 2] : vector<1x16x128xf32> to vector<1xf32>
      %30 = vector.shape_cast %29 : vector<1xf32> to vector<1x1x1xf32>
      %31 = vector.extract %30[0, 0, 0] : f32 from vector<1x1x1xf32>
      %32 = vector.broadcast %31 : f32 to vector<1x8x128xf32>
      %c0_24 = arith.constant 0 : index
      %c0_25 = arith.constant 0 : index
      %c0_26 = arith.constant 0 : index
      %33 = vector.load %arg5[%c0_24, %c0_25, %c0_26] : memref<1x8x128xf32, #tpu.memory_space<vmem>>, vector<1x8x128xf32>
      tpu.vector_store %arg5[%c0_24, %c0_25, %c0_26], %32 {strides = array<i32>} : memref<1x8x128xf32, #tpu.memory_space<vmem>>, vector<1x8x128xf32>,
    } else {
    }
    return
  }
  func.func @transform_0(%arg0: i32, %arg1: i32) -> (i32, i32) {
    %c1_i32 = arith.constant 1 : i32
    %0 = arith.muli %arg0, %c1_i32 : i32
    %1 = arith.addi %0, %arg1 : i32
    %c0_i32 = arith.constant 0 : i32
    %2 = arith.minsi %1, %c0_i32 : i32
    %c0_i32_0 = arith.constant 0 : i32
    %c0_i32_1 = arith.constant 0 : i32
    return %2, %c0_i32_0 : i32, i32
  }
  func.func @transform_1(%arg0: i32, %arg1: i32) -> (i32, i32) {
    %c1_i32 = arith.constant 1 : i32
    %0 = arith.muli %arg0, %c1_i32 : i32
    %1 = arith.addi %0, %arg1 : i32
    %c0_i32 = arith.constant 0 : i32
    %2 = arith.minsi %1, %c0_i32 : i32
    %c0_i32_0 = arith.constant 0 : i32
    %c0_i32_1 = arith.constant 0 : i32
    return %2, %c0_i32_0 : i32, i32
  }
  func.func @transform_2(%arg0: i32, %arg1: i32) -> (i32, i32, i32) {
    %c0_i32 = arith.constant 0 : i32
    %c0_i32_0 = arith.constant 0 : i32
    %c0_i32_1 = arith.constant 0 : i32
    return %arg0, %c0_i32, %c0_i32_0 : i32, i32, i32
  }
  func.func @transform_3(%arg0: i32, %arg1: i32) -> (i32, i32, i32) {
    %c0_i32 = arith.constant 0 : i32
    %c0_i32_0 = arith.constant 0 : i32
    %c0_i32_1 = arith.constant 0 : i32
    return %arg0, %c0_i32, %c0_i32_0 : i32, i32, i32
  }
}

</mosaic_0001>

<llo_original>
// kernel: tpu_custom_call.1
$region0: #{tpu_custom_call.1}
  #allocation0 [shape = 'u32[]', space=smem, size = 0x4, offset = 0x4, fixed_abs, tag = 'smem constant byte address 0x4 - core index']
  #allocation1 [shape = 'u32[144,128]{1,0:T(1,128)}', space=vmem, size = 0x12000, scoped, tag = 'internal scratch']
  #allocation2 [shape = 'f32[16,128]{1,0:T(8,128)}', space=vmem, size = 0x2000, scoped, tag = 'scratch operand']
  #allocation3 [shape = 'f32[16,128]{1,0:T(8,128)}', space=vmem, size = 0x2000, scoped, tag = 'scratch operand']
  %s0 = inlined_call_operand.hbm [shape: f32[16,128], index: 0, kind: input, shape index: {}]
  %s1 = inlined_call_operand.hbm [shape: f32[16,128], index: 1, kind: input, shape index: {}]
  %s2 = inlined_call_operand.hbm [shape: f32[1,8,128], index: 2, kind: output, shape index: {0}]
  %s3 = inlined_call_operand.hbm [shape: f32[1,8,128], index: 3, kind: output, shape index: {1}]
  %4 = xla_tuple %s2, %s3
  %s5 = sld [smem:[#allocation0]]
  $region42: #{tpu_custom_call.1} parent=0
    _
  %s7 = ssub.s32 1, %s5
  %s8 = scalar_select 0, %s7, %s5
  $region1: #{tpu_custom_call.1} parent=0
    #allocation4 [shape = 'u8[8192]{0}', space=vmem, size = 0x2000, scoped, tag = 'input window, operand 0, single buffered']
    #allocation5 [shape = 's32[1]{0}', space=sflag, size = 0x4, scoped, tag = 'scoped memory for tpu_custom_call.1']
    #allocation6 [shape = 's32[1]{0}', space=sflag, size = 0x4, scoped, tag = 'scoped memory for tpu_custom_call.1']
    #allocation7 [shape = 'u8[8192]{0}', space=vmem, size = 0x2000, scoped, tag = 'input window, operand 1, single buffered']
    #allocation8 [shape = 's32[1]{0}', space=sflag, size = 0x4, scoped, tag = 'scoped memory for tpu_custom_call.1']
    #allocation9 [shape = 'u8[4096]{0}', space=vmem, size = 0x1000, scoped, tag = 'output window, operand 0, single buffered']
    #allocation10 [shape = 'u8[4096]{0}', space=vmem, size = 0x1000, scoped, tag = 'output window, operand 1, single buffered']
    #allocation11 [shape = 's32[1]{0}', space=sflag, size = 0x4, scoped, tag = 'scoped memory for tpu_custom_call.1']
    %9 = vsyncpa [#allocation5], 0
    %10 = vsyncpa [#allocation8], 0
    %11 = vsyncpa [#allocation6], 0
    %12 = vsyncpa [#allocation11], 0
    // Predicated region
    $region2: #{tpu_custom_call.1} parent=1 // pred_check
      _
    $region3: #{tpu_custom_call.1} parent=1 // pred_check_branch
      %14 = sbr.rel (0) target = $region5
    $region4: #{tpu_custom_call.1} parent=1 // pred_region
      %s15 = sadd.s32 0, 0
      %p16 = scmp.lt.s32.totalorder %s15, 0
      %s17 = scalar_select %p16, %s15, 0
      %s18 = smul.u32 2, %s17
      %s20 = ssub.s32 256, 256
      %21 = vsyncadd [#allocation5], %s20
      %s22 = smul.addr %s18, 128
      %s23 = scalar_lea.hbm %s0, %s22
      %s24 = sshll.u32 [#allocation4], 4
      %s25 = int_to_ptr.vmem [resolvable:$true] %s24
      %30 = dma.hbm_to_vmem [thread:$0]  %s23, 256, %s25, [#allocation5], 128, 128, 8
    $region5: #{tpu_custom_call.1} parent=1 // pred_fallthru
      _
    // Predicated region
    $region6: #{tpu_custom_call.1} parent=1 // pred_check
      _
    $region7: #{tpu_custom_call.1} parent=1 // pred_check_branch
      %32 = sbr.rel (0) target = $region9
    $region8: #{tpu_custom_call.1} parent=1 // pred_region
      %s33 = sadd.s32 0, 0
      %p34 = scmp.lt.s32.totalorder %s33, 0
      %s35 = scalar_select %p34, %s33, 0
      %s36 = smul.u32 2, %s35
      %s38 = ssub.s32 256, 256
      %39 = vsyncadd [#allocation8], %s38
      %s40 = smul.addr %s36, 128
      %s41 = scalar_lea.hbm %s1, %s40
      %s42 = sshll.u32 [#allocation7], 4
      %s43 = int_to_ptr.vmem [resolvable:$true] %s42
      %48 = dma.hbm_to_vmem [thread:$0]  %s41, 256, %s43, [#allocation8], 128, 128, 8
    $region9: #{tpu_custom_call.1} parent=1 // pred_fallthru
      _
    // Predicated region
    $region10: #{tpu_custom_call.1} parent=1 // pred_check
      _
    $region11: #{tpu_custom_call.1} parent=1 // pred_check_branch
      %50 = sbr.rel (0) target = $region13
    $region12: #{tpu_custom_call.1} parent=1 // pred_region
      %51 = dma.done [#allocation5], 256
    $region13: #{tpu_custom_call.1} parent=1 // pred_fallthru
      _
    // Predicated region
    $region14: #{tpu_custom_call.1} parent=1 // pred_check
      _
    $region15: #{tpu_custom_call.1} parent=1 // pred_check_branch
      %53 = sbr.rel (0) target = $region17
    $region16: #{tpu_custom_call.1} parent=1 // pred_region
      %54 = dma.done [#allocation8], 256
    $region17: #{tpu_custom_call.1} parent=1 // pred_fallthru
      _
    %s55 = sadd.s32 0, 0
    %p56 = scmp.lt.s32.totalorder %s55, 0
    %s57 = scalar_select %p56, %s55, 0
    %s58 = smul.u32 2, %s57
    %s59 = sadd.s32 0, 0
    %p60 = scmp.lt.s32.totalorder %s59, 0
    %s61 = scalar_select %p60, %s59, 0
    %s62 = smul.u32 2, %s61
    %p63 = scmp.eq.s32.totalorder 0, 0
    // Predicated region
    $region18: #{tpu_custom_call.1} parent=1 // pred_check
      %p64 = pneg %p63
    $region19: #{tpu_custom_call.1} parent=1 // pred_check_branch
      %66 = sbr.rel (%p64) target = $region21
    $region20: #{tpu_custom_call.1} parent=1 // pred_region
      %67 = vst [vmem:[#allocation2] sm:$0xff] 0.0
      %68 = vst [vmem:[#allocation2 + $0x8] sm:$0xff] 0.0
      %69 = vst [vmem:[#allocation3] sm:$0xff] 0.0
      %70 = vst [vmem:[#allocation3 + $0x8] sm:$0xff] 0.0
    $region21: #{tpu_custom_call.1} parent=1 // pred_fallthru
      _
    %v71 = vld [vmem:[#allocation4] sm:$0xff]
    %v72 = vld [vmem:[#allocation4 + $0x8] sm:$0xff]
    %v73 = vld [vmem:[#allocation7] sm:$0xff]
    %v74 = vld [vmem:[#allocation7 + $0x8] sm:$0xff]
    %v75 = vmul.f32 %v71, %v73
    %v76 = vmul.f32 %v72, %v74
    %v77 = vld [vmem:[#allocation2] sm:$0xff]
    %v78 = vld [vmem:[#allocation2 + $0x8] sm:$0xff]
    %v79 = vadd.f32 %v77, %v75
    %v80 = vadd.f32 %v78, %v76
    %81 = vst [vmem:[#allocation2] sm:$0xff] %v79
    %82 = vst [vmem:[#allocation2 + $0x8] sm:$0xff] %v80
    %v83 = vld [vmem:[#allocation3] sm:$0xff]
    %v84 = vld [vmem:[#allocation3 + $0x8] sm:$0xff]
    %v85 = vmul.f32 %v71, 0.3
    %v86 = vmul.f32 %v72, 0.3
    %v87 = vmul.f32 %v73, 0.7
    %v88 = vmul.f32 %v74, 0.7
    %v89 = vadd.f32 %v85, %v87
    %v90 = vadd.f32 %v86, %v88
    %v91 = vadd.f32 %v83, %v89
    %v92 = vadd.f32 %v84, %v90
    %93 = vst [vmem:[#allocation3] sm:$0xff] %v91
    %94 = vst [vmem:[#allocation3 + $0x8] sm:$0xff] %v92
    // Predicated region
    $region22: #{tpu_custom_call.1} parent=1 // pred_check
      %p95 = pneg %p63
    $region23: #{tpu_custom_call.1} parent=1 // pred_check_branch
      %97 = sbr.rel (%p95) target = $region25
    $region24: #{tpu_custom_call.1} parent=1 // pred_region
      %v98 = vld [vmem:[#allocation2] sm:$0xff]
      %v99 = vld [vmem:[#allocation2 + $0x8] sm:$0xff]
      %v100 = vadd.f32 %v98, %v99
      %101 = vadd.xlane.f32.xlu0 %v100
      %v102 = vpop.xlane.xlu0 %101
      %v103 = vrot.slane %v102, 4
      %v104 = vadd.f32 %v102, %v103
      %v105 = vrot.slane %v104, 2
      %v106 = vadd.f32 %v104, %v105
      %v107 = vrot.slane %v106, 1
      %v108 = vadd.f32 %v106, %v107
      %s109 = vtos %v108
      %v110 = vstv %s109
      %111 = vst [vmem:[#allocation9] sm:$0xff] %v110
      %v112 = vld [vmem:[#allocation3] sm:$0xff]
      %v113 = vld [vmem:[#allocation3 + $0x8] sm:$0xff]
      %v114 = vadd.f32 %v112, %v113
      %115 = vadd.xlane.f32.xlu0 %v114
      %v116 = vpop.xlane.xlu0 %115
      %v117 = vrot.slane %v116, 4
      %v118 = vadd.f32 %v116, %v117
      %v119 = vrot.slane %v118, 2
      %v120 = vadd.f32 %v118, %v119
      %v121 = vrot.slane %v120, 1
      %v122 = vadd.f32 %v120, %v121
      %s123 = vtos %v122
      %v124 = vstv %s123
      %125 = vst [vmem:[#allocation10] sm:$0xff] %v124
    $region25: #{tpu_custom_call.1} parent=1 // pred_fallthru
      _
    // Predicated region
    $region26: #{tpu_custom_call.1} parent=1 // pred_check
      _
    $region27: #{tpu_custom_call.1} parent=1 // pred_check_branch
      %127 = sbr.rel (0) target = $region29
    $region28: #{tpu_custom_call.1} parent=1 // pred_region
      %s129 = ssub.s32 128, 128
      %130 = vsyncadd [#allocation6], %s129
      %s132 = sshll.u32 [#allocation9], 4
      %s133 = int_to_ptr.vmem [resolvable:$true] %s132
      %135 = dma.vmem_to_hbm [thread:$0]  %s133, 128, %s2, [#allocation6]
    $region29: #{tpu_custom_call.1} parent=1 // pred_fallthru
      _
    // Predicated region
    $region30: #{tpu_custom_call.1} parent=1 // pred_check
      _
    $region31: #{tpu_custom_call.1} parent=1 // pred_check_branch
      %137 = sbr.rel (0) target = $region33
    $region32: #{tpu_custom_call.1} parent=1 // pred_region
      %s139 = ssub.s32 128, 128
      %140 = vsyncadd [#allocation11], %s139
      %s142 = sshll.u32 [#allocation10], 4
      %s143 = int_to_ptr.vmem [resolvable:$true] %s142
      %145 = dma.vmem_to_hbm [thread:$0]  %s143, 128, %s3, [#allocation11]
    $region33: #{tpu_custom_call.1} parent=1 // pred_fallthru
      _
    // Predicated region
    $region34: #{tpu_custom_call.1} parent=1 // pred_check
      _
    $region35: #{tpu_custom_call.1} parent=1 // pred_check_branch
      %147 = sbr.rel (0) target = $region37
    $region36: #{tpu_custom_call.1} parent=1 // pred_region
      %148 = dma.done [#allocation6], 128
    $region37: #{tpu_custom_call.1} parent=1 // pred_fallthru
      _
    // Predicated region
    $region38: #{tpu_custom_call.1} parent=1 // pred_check
      _
    $region39: #{tpu_custom_call.1} parent=1 // pred_check_branch
      %150 = sbr.rel (0) target = $region41
    $region40: #{tpu_custom_call.1} parent=1 // pred_region
      %151 = dma.done [#allocation11], 128
    $region41: #{tpu_custom_call.1} parent=1 // pred_fallthru
      _
    %152 = vsyncpa [#allocation5], 1
    %153 = vsyncpa [#allocation8], 1
    %154 = vsyncpa [#allocation6], 1
    %155 = vsyncpa [#allocation11], 1

</llo_original>
